<compile_context>
chip_gen: v5e
topology: v5e:2x2
jax: 0.10.0
libtpu: 0.0.40
codegen_flags: <defaults>
</compile_context>

<pallas_src>
import jax
import jax.numpy as jnp
from jax.experimental import pallas as pl
from jax.experimental.pallas import tpu as pltpu


def _conv1x1_kernel(x_ref, w_ref, b_ref, o_ref):
    # x_ref: (Cin, t_hw)   w_ref: (Cout, Cin)   b_ref: (Cout, 1)   o_ref: (Cout, t_hw)
    acc = jnp.dot(w_ref[...], x_ref[...], preferred_element_type=jnp.float32)
    o_ref[...] = (acc + b_ref[...].astype(jnp.float32)).astype(o_ref.dtype)


def conv1x1_nchw_pallas(x3d, w2d, b2d, *, max_tile=2048):
    """Per-pixel matmul in channel-first layout.

    x3d: (N, Cin, HW); w2d: (Cout, Cin); b2d: (Cout, 1) -> (N, Cout, HW).
    """
    N, Cin, HW = x3d.shape
    Cout = w2d.shape[0]

    # Lane-dense spatial tile: full extent if small, else a 128-multiple (max_tile).
    assert max_tile % 128 == 0
    t_hw = HW if HW <= max_tile else max_tile
    grid = (N, pl.cdiv(HW, t_hw))

    nbytes = x3d.dtype.itemsize
    cost = pl.CostEstimate(
        flops=2 * N * HW * Cin * Cout,
        transcendentals=0,
        bytes_accessed=(N * HW * (Cin + Cout) + Cout * Cin + Cout) * nbytes,
    )

    return pl.pallas_call(
        _conv1x1_kernel,
        out_shape=jax.ShapeDtypeStruct((N, Cout, HW), x3d.dtype),
        grid_spec=pltpu.PrefetchScalarGridSpec(
            num_scalar_prefetch=0,
            grid=grid,
            in_specs=[
                pl.BlockSpec((pl.Squeezed(), Cin, t_hw), lambda n, t: (n, 0, t)),
                pl.BlockSpec((Cout, Cin), lambda n, t: (0, 0)),
                pl.BlockSpec((Cout, 1), lambda n, t: (0, 0)),
            ],
            out_specs=pl.BlockSpec((pl.Squeezed(), Cout, t_hw),
                                   lambda n, t: (n, 0, t)),
        ),
        compiler_params=pltpu.CompilerParams(
            dimension_semantics=("parallel", "parallel")),
        cost_estimate=cost,
    )(x3d, w2d, b2d)


def pixel_shuffle_nchw(y, r):
    """PixelShuffle: (N, C*r*r, H, W) -> (N, C, H*r, W*r), matching torch."""
    N, Crr, H, W = y.shape
    C = Crr // (r * r)
    y = y.reshape(N, C, r, r, H, W)
    y = jnp.transpose(y, (0, 1, 4, 2, 5, 3))      # N, C, H, r, W, r
    return y.reshape(N, C, H * r, W * r)


def patch_unembed_forward(x_nchw, w_oihw, b, patch_size, *, max_tile=2048):
    """Full PatchUnEmbed forward (kernel_size=1 path).

    x_nchw: (N, embed_dim, H, W)
    w_oihw: (Cout, embed_dim, 1, 1)  torch Conv2d weight layout
    b:      (Cout,)
    returns (N, out_chans, H*patch_size, W*patch_size)
    """
    N, Cin, H, W = x_nchw.shape
    Cout = w_oihw.shape[0]

    x3d = x_nchw.reshape(N, Cin, H * W)                     # contiguous -> free reshape
    w2d = w_oihw.reshape(Cout, Cin).astype(x_nchw.dtype)    # no transpose needed
    b2d = b.reshape(Cout, 1).astype(x_nchw.dtype)

    y = conv1x1_nchw_pallas(x3d, w2d, b2d, max_tile=max_tile)   # (N, Cout, HW)
    y = y.reshape(N, Cout, H, W)                                # contiguous -> free reshape
    return pixel_shuffle_nchw(y, patch_size)
    # TODO(synk): kernel_size>1 (reflect-padded KxK conv) path not implemented; the
    # module default is kernel_size=1 which is what this kernel covers.


if __name__ == "__main__":
    # Config consistent with the module: embed_dim=32, patch_size=4, out_chans=3.
    N, embed_dim, H, W = 2, 32, 16, 16
    patch_size, out_chans = 4, 3
    Cout = out_chans * patch_size ** 2                      # 48

    key = jax.random.PRNGKey(0)
    kx, kw, kb = jax.random.split(key, 3)
    x = jax.random.normal(kx, (N, embed_dim, H, W), dtype=jnp.float32)
    w = jax.random.normal(kw, (Cout, embed_dim, 1, 1), dtype=jnp.float32) * 0.05
    b = jax.random.normal(kb, (Cout,), dtype=jnp.float32) * 0.05

    out = jax.block_until_ready(patch_unembed_forward(x, w, b, patch_size))
    assert out.shape == (N, out_chans, H * patch_size, W * patch_size), out.shape

    # Pure-JAX reference (1x1 conv via einsum + pixel shuffle).
    ref_conv = jnp.einsum("nchw,oc->nohw", x, w.reshape(Cout, embed_dim)) \
        + b[None, :, None, None]
    ref = pixel_shuffle_nchw(ref_conv, patch_size)
    assert jnp.allclose(out, ref, atol=1e-4, rtol=1e-4), \
        float(jnp.max(jnp.abs(out - ref)))

    # Second check: spatial size that is not a multiple of 128 (exercises the
    # full-extent / non-divisible tile path without any assert or padding).
    H2 = W2 = 10
    x2 = jax.random.normal(kx, (N, embed_dim, H2, W2), dtype=jnp.float32)
    out2 = jax.block_until_ready(patch_unembed_forward(x2, w, b, patch_size))
    ref2 = pixel_shuffle_nchw(
        jnp.einsum("nchw,oc->nohw", x2, w.reshape(Cout, embed_dim))
        + b[None, :, None, None], patch_size)
    assert out2.shape == (N, out_chans, H2 * patch_size, W2 * patch_size), out2.shape
    assert jnp.allclose(out2, ref2, atol=1e-4, rtol=1e-4), \
        float(jnp.max(jnp.abs(out2 - ref2)))

    print("KERNEL_OK")
</pallas_src>

<mosaic_0001>
module attributes {stable_mosaic.version = 11 : i64} {
  func.func @_conv1x1_kernel(%arg0: i32, %arg1: i32, %arg2: memref<1x32x256xf32, #tpu.memory_space<vmem>>, %arg3: memref<48x32xf32, #tpu.memory_space<vmem>>, %arg4: memref<48x1xf32, #tpu.memory_space<vmem>>, %arg5: memref<1x48x256xf32, #tpu.memory_space<vmem>>) attributes {dimension_semantics = [#tpu.dimension_semantics<parallel>, #tpu.dimension_semantics<parallel>], iteration_bounds = array<i64: 2, 1>, scalar_prefetch = 0 : i64, scratch_operands = 0 : i64, tpu.core_type = #tpu.core_type<tc>, window_params = [{transform_indices = @transform_0, window_bounds = array<i64: 1, 32, 256>}, {pipeline_mode = #tpu.pipeline_mode<synchronous>, transform_indices = @transform_1, window_bounds = array<i64: 48, 32>}, {pipeline_mode = #tpu.pipeline_mode<synchronous>, transform_indices = @transform_2, window_bounds = array<i64: 48, 1>}, {transform_indices = @transform_3, window_bounds = array<i64: 1, 48, 256>}]} {
    %c0 = arith.constant 0 : index
    %c0_0 = arith.constant 0 : index
    %0 = vector.load %arg3[%c0, %c0_0] : memref<48x32xf32, #tpu.memory_space<vmem>>, vector<48x32xf32>
    %c0_1 = arith.constant 0 : index
    %c0_2 = arith.constant 0 : index
    %c0_3 = arith.constant 0 : index
    %1 = vector.load %arg2[%c0_1, %c0_2, %c0_3] : memref<1x32x256xf32, #tpu.memory_space<vmem>>, vector<1x32x256xf32>
    %2 = vector.shape_cast %1 : vector<1x32x256xf32> to vector<32x256xf32>
    %cst = arith.constant dense<0.000000e+00> : vector<48x256xf32>
    %3 = tpu.matmul %0, %2, %cst {dimension_numbers = #tpu.dot_dimension_numbers<[1], [0], [0], [1], [0, 0, 1, 1], [], []>} : vector<48x32xf32>, vector<32x256xf32>, vector<48x256xf32> -> vector<48x256xf32>
    %c0_4 = arith.constant 0 : index
    %c0_5 = arith.constant 0 : index
    %4 = vector.load %arg4[%c0_4, %c0_5] : memref<48x1xf32, #tpu.memory_space<vmem>>, vector<48x1xf32>
    %5 = vector.broadcast %4 : vector<48x1xf32> to vector<48x256xf32>
    %6 = arith.addf %3, %5 : vector<48x256xf32>
    %c0_6 = arith.constant 0 : index
    %c0_7 = arith.constant 0 : index
    %c0_8 = arith.constant 0 : index
    %7 = vector.load %arg5[%c0_6, %c0_7, %c0_8] : memref<1x48x256xf32, #tpu.memory_space<vmem>>, vector<1x48x256xf32>
    %8 = vector.shape_cast %7 : vector<1x48x256xf32> to vector<48x256xf32>
    %9 = vector.shape_cast %6 : vector<48x256xf32> to vector<1x48x256xf32>
    tpu.vector_store %arg5[%c0_6, %c0_7, %c0_8], %9 {strides = array<i32>} : memref<1x48x256xf32, #tpu.memory_space<vmem>>, vector<1x48x256xf32>,
    return
  }
  func.func @transform_0(%arg0: i32, %arg1: i32) -> (i32, i32, i32) {
    %c0_i32 = arith.constant 0 : i32
    %c0_i32_0 = arith.constant 0 : i32
    return %arg0, %c0_i32, %arg1 : i32, i32, i32
  }
  func.func @transform_1(%arg0: i32, %arg1: i32) -> (i32, i32) {
    %c0_i32 = arith.constant 0 : i32
    %c0_i32_0 = arith.constant 0 : i32
    %c0_i32_1 = arith.constant 0 : i32
    return %c0_i32, %c0_i32_0 : i32, i32
  }
  func.func @transform_2(%arg0: i32, %arg1: i32) -> (i32, i32) {
    %c0_i32 = arith.constant 0 : i32
    %c0_i32_0 = arith.constant 0 : i32
    %c0_i32_1 = arith.constant 0 : i32
    return %c0_i32, %c0_i32_0 : i32, i32
  }
  func.func @transform_3(%arg0: i32, %arg1: i32) -> (i32, i32, i32) {
    %c0_i32 = arith.constant 0 : i32
    %c0_i32_0 = arith.constant 0 : i32
    return %arg0, %c0_i32, %arg1 : i32, i32, i32
  }
}

</mosaic_0001>

<llo_original>
// kernel: tpu_custom_call.1
$region0: #{tpu_custom_call.1}
  #allocation0 [shape = 'u32[]', space=smem, size = 0x4, offset = 0x4, fixed_abs, tag = 'smem constant byte address 0x4 - core index']
  #allocation1 [shape = 'u32[72,128]{1,0:T(1,128)}', space=vmem, size = 0x9000, scoped, tag = 'internal scratch']
  %s0 = inlined_call_operand.vmem [shape: f32[2,32,256], index: 0, kind: input, shape index: {}]
  %s1 = inlined_call_operand.vmem [shape: f32[48,32], index: 1, kind: input, shape index: {}]
  %s2 = inlined_call_operand.vmem [shape: f32[48,1], index: 2, kind: input, shape index: {}]
  %s3 = inlined_call_operand.hbm [shape: f32[2,48,256], index: 3, kind: output, shape index: {}]
  %s4 = sld [smem:[#allocation0]]
  $region45: #{tpu_custom_call.1} parent=0
    _
  %s6 = ssub.s32 1, %s4
  %s7 = scalar_select 0, %s6, %s4
  $region1: #{tpu_custom_call.1} parent=0
    #allocation2 [shape = 'u8[98304]{0}', space=vmem, size = 0x18000, scoped, tag = 'output window, operand 0']
    #allocation3 [shape = 's32[2]{0}', space=sflag, size = 0x8, scoped, tag = 'scoped memory for tpu_custom_call.1']
    %8 = vsyncpa [#allocation3], 0
    %s9 = scalar_lea.sflag [#allocation3], 1
    %10 = vsyncpa %s9, 0
    loop: start=0, step=1, limit=4
    $region2: #{tpu_custom_call.1} parent=1 // loop_pre_header
      _
    $region3: #{tpu_custom_call.1} parent=1 // loop_header
      %s12 = sphi 0, %s16
      %p13 = scmp.ge.s32.totalorder %s12, 4
      %s19 = sphi 0, %s31
      %s20 = sphi 0, %s27
      %s21 = sphi 0, %s19
      %s22 = sphi 0, %s20
      %s23 = sphi 0, %s21
      %s24 = sphi 0, %s22
      %s36 = sphi 0, %s38
      %s39 = sphi 0, %s36
      %s40 = sphi 0, %s39
      %s56 = sphi 0, %s40
      %s60 = sphi 0, %s60
      %s62 = sphi 0, %s60
      %s63 = sphi 0, %s62
      %s77 = sphi 0, %s63
      %s81 = sphi 0, %s81
      %s83 = sphi 0, %s81
      %s84 = sphi 0, %s83
      %s98 = sphi 0, %s84
      %s106 = sphi 0, %s108
      %s109 = sphi 0, %s106
      %s110 = sphi 0, %s109
      %s126 = sphi 0, %s110
    $region4: #{tpu_custom_call.1} parent=1 // loop_header_branch
      %15 = sbr.rel (%p13) target = $region8
    $region5: #{tpu_custom_call.1} parent=1 // loop_body
      %s17 = ssub.s32 %s12, 1
      %s18 = ssub.s32 %s12, 2
      %s25 = sadd.s32 1, %s20
      %p26 = scmp.ge.s32.totalorder %s25, 1
      %s27 = scalar_select %p26, 0, %s25
      %s28 = sadd.s32 1, %s19
      %s29 = scalar_select %p26, %s28, %s19
      %p30 = scmp.ge.s32.totalorder %s29, 2
      %s31 = scalar_select %p30, 0, %s29
      %s32 = ssub.s32 %s19, %s31
      %s33 = ssub.s32 %s20, %s27
      %s34 = sor.u32 %s32, %s33
      %p35 = scmp.eq.s32.totalorder %s34, 0
      %s37 = sadd.s32 %s36, 1
      %s38 = scalar_select %p35, %s36, %s37
      %p41 = pneg %p35
      %p42 = scmp.eq.s32.totalorder %s12, 1
      %p43 = por %p41, %p42
      %p44 = scmp.ne.s32.totalorder %s36, %s39
      %p45 = scmp.eq.s32.totalorder %s12, 0
      %p46 = por %p44, %p45
      %p47 = scmp.ne.s32.totalorder %s36, %s39
      %p48 = scmp.eq.s32.totalorder %s17, 1
      %p49 = por %p47, %p48
      %p50 = scmp.ne.s32.totalorder %s39, %s40
      %p51 = scmp.eq.s32.totalorder %s17, 0
      %p52 = por %p50, %p51
      %p53 = scmp.ne.s32.totalorder %s39, %s40
      %p54 = scmp.eq.s32.totalorder %s18, 1
      %p55 = por %p53, %p54
      %p57 = scmp.ne.s32.totalorder %s40, %s56
      %p58 = scmp.eq.s32.totalorder %s18, 0
      %p59 = por %p57, %p58
      %s61 = sadd.s32 %s60, 1
      %p64 = scmp.eq.s32.totalorder %s12, 1
      %p65 = scmp.ne.s32.totalorder %s60, %s62
      %p66 = scmp.eq.s32.totalorder %s12, 0
      %p67 = por %p65, %p66
      %p68 = scmp.ne.s32.totalorder %s60, %s62
      %p69 = scmp.eq.s32.totalorder %s17, 1
      %p70 = por %p68, %p69
      %p71 = scmp.ne.s32.totalorder %s62, %s63
      %p72 = scmp.eq.s32.totalorder %s17, 0
      %p73 = por %p71, %p72
      %p74 = scmp.ne.s32.totalorder %s62, %s63
      %p75 = scmp.eq.s32.totalorder %s18, 1
      %p76 = por %p74, %p75
      %p78 = scmp.ne.s32.totalorder %s63, %s77
      %p79 = scmp.eq.s32.totalorder %s18, 0
      %p80 = por %p78, %p79
      %s82 = sadd.s32 %s81, 1
      %p85 = scmp.eq.s32.totalorder %s12, 1
      %p86 = scmp.ne.s32.totalorder %s81, %s83
      %p87 = scmp.eq.s32.totalorder %s12, 0
      %p88 = por %p86, %p87
      %p89 = scmp.ne.s32.totalorder %s81, %s83
      %p90 = scmp.eq.s32.totalorder %s17, 1
      %p91 = por %p89, %p90
      %p92 = scmp.ne.s32.totalorder %s83, %s84
      %p93 = scmp.eq.s32.totalorder %s17, 0
      %p94 = por %p92, %p93
      %p95 = scmp.ne.s32.totalorder %s83, %s84
      %p96 = scmp.eq.s32.totalorder %s18, 1
      %p97 = por %p95, %p96
      %p99 = scmp.ne.s32.totalorder %s84, %s98
      %p100 = scmp.eq.s32.totalorder %s18, 0
      %p101 = por %p99, %p100
      %s102 = ssub.s32 %s19, %s31
      %s103 = ssub.s32 %s20, %s27
      %s104 = sor.u32 %s102, %s103
      %p105 = scmp.eq.s32.totalorder %s104, 0
      %s107 = sadd.s32 %s106, 1
      %s108 = scalar_select %p105, %s106, %s107
      %p111 = pneg %p105
      %p112 = scmp.eq.s32.totalorder %s12, 1
      %p113 = por %p111, %p112
      %p114 = scmp.ne.s32.totalorder %s106, %s109
      %p115 = scmp.eq.s32.totalorder %s12, 0
      %p116 = por %p114, %p115
      %p117 = scmp.ne.s32.totalorder %s106, %s109
      %p118 = scmp.eq.s32.totalorder %s17, 1
      %p119 = por %p117, %p118
      %p120 = scmp.ne.s32.totalorder %s109, %s110
      %p121 = scmp.eq.s32.totalorder %s17, 0
      %p122 = por %p120, %p121
      %p123 = scmp.ne.s32.totalorder %s109, %s110
      %p124 = scmp.eq.s32.totalorder %s18, 1
      %p125 = por %p123, %p124
      %p127 = scmp.ne.s32.totalorder %s110, %s126
      %p128 = scmp.eq.s32.totalorder %s18, 0
      %p129 = por %p127, %p128
      %p130 = scmp.le.s32.totalorder 1, %s12
      %p131 = scmp.lt.s32.totalorder %s12, 3
      %p132 = pnand %p130, %p131
      %p133 = pneg %p132
      // Predicated region
      $region9: #{tpu_custom_call.1} parent=5 // pred_check
        _
      $region10: #{tpu_custom_call.1} parent=5 // pred_check_branch
        %135 = sbr.rel (%p132) target = $region12
      $region11: #{tpu_custom_call.1} parent=5 // pred_region
        %s136 = ssub.s32 %s12, 1
        // Predicated region
        $region13: #{tpu_custom_call.1} parent=11 // pred_check
          %p137 = pneg %p73
        $region14: #{tpu_custom_call.1} parent=11 // pred_check_branch
          %139 = sbr.rel (%p137) target = $region16
        $region15: #{tpu_custom_call.1} parent=11 // pred_region
          _
        $region16: #{tpu_custom_call.1} parent=11 // pred_fallthru
          _
        // Predicated region
        $region17: #{tpu_custom_call.1} parent=11 // pred_check
          %p140 = pneg %p94
        $region18: #{tpu_custom_call.1} parent=11 // pred_check_branch
          %142 = sbr.rel (%p140) target = $region20
        $region19: #{tpu_custom_call.1} parent=11 // pred_region
          _
        $region20: #{tpu_custom_call.1} parent=11 // pred_fallthru
          _
      $region12: #{tpu_custom_call.1} parent=5 // pred_fallthru
        _
      %p143 = scmp.lt.s32.totalorder %s12, 2
      // Predicated region
      $region21: #{tpu_custom_call.1} parent=5 // pred_check
        %p144 = pneg %p143
      $region22: #{tpu_custom_call.1} parent=5 // pred_check_branch
        %146 = sbr.rel (%p144) target = $region24
      $region23: #{tpu_custom_call.1} parent=5 // pred_region
        // Predicated region
        $region25: #{tpu_custom_call.1} parent=23 // pred_check
          %p147 = pneg %p46
        $region26: #{tpu_custom_call.1} parent=23 // pred_check_branch
          %149 = sbr.rel (%p147) target = $region28
        $region27: #{tpu_custom_call.1} parent=23 // pred_region
          %s150 = smul.u32 2, %s20
          %p151 = scmp.lt.s32.totalorder %s19, 1
          %s152 = scalar_select %p151, %s19, 1
          %p153 = scmp.lt.s32.totalorder %s150, 1
          %s154 = scalar_select %p153, %s150, 1
          %s155 = smul.addr %s152, 8
          %s156 = sadd.s32 %s154, %s155
          %s157 = smul.addr %s156, 8
          %s158 = scalar_lea.vmem %s0, %s157
          %s159 = smul.u32 2, %s20
        $region28: #{tpu_custom_call.1} parent=23 // pred_fallthru
          _
      $region24: #{tpu_custom_call.1} parent=5 // pred_fallthru
        _
      %p160 = scmp.le.s32.totalorder 1, %s12
      %p161 = scmp.lt.s32.totalorder %s12, 3
      %p162 = pnand %p160, %p161
      %p163 = pneg %p162
      // Predicated region
      $region29: #{tpu_custom_call.1} parent=5 // pred_check
        _
      $region30: #{tpu_custom_call.1} parent=5 // pred_check_branch
        %165 = sbr.rel (%p162) target = $region32
      $region31: #{tpu_custom_call.1} parent=5 // pred_region
        %s166 = ssub.s32 %s12, 1
        %s167 = smul.u32 2, %s22
        %p168 = scmp.lt.s32.totalorder %s21, 1
        %s169 = scalar_select %p168, %s21, 1
        %p170 = scmp.lt.s32.totalorder %s167, 1
        %s171 = scalar_select %p170, %s167, 1
        %s172 = smul.addr %s169, 8
        %s173 = sadd.s32 %s171, %s172
        %s174 = smul.addr %s173, 8
        %s175 = scalar_lea.vmem %s0, %s174
        %p176 = pneg %p52
        %p177 = pneg %p49
        %p178 = pneg %p73
        %p179 = pneg %p70
        %p180 = pneg %p94
        %p181 = pneg %p91
        %p182 = pneg %p122
        %p183 = pneg %p119
        %s184 = sand.u32 %s109, 1
        %s185 = scalar_lea.sflag [#allocation3], %s184
        %s186 = sand.u32 %s109, 1
        %s187 = smul.addr %s186, 96
        %s188 = scalar_lea.vmem [#allocation2], %s187
        %s189 = smul.u32 2, %s22
        %p190 = scmp.lt.s32.totalorder %s21, 1
        %s191 = scalar_select %p190, %s21, 1
        %p192 = scmp.lt.s32.totalorder %s189, 1
        %s193 = scalar_select %p192, %s189, 1
        %s194 = smul.addr %s191, 8
        %s195 = sadd.s32 %s193, %s194
        %s196 = smul.addr %s195, 8
        %s197 = scalar_lea.vmem %s0, %s196
        %s198 = smul.u32 2, %s22
        %s199 = smul.u32 2, %s22
        %v200 = vld [vmem:[%s1] sm:$0xff]
        %v201 = vld [vmem:[%s1 + $0x8] sm:$0xff]
        %v202 = vld [vmem:[%s1 + $0x10] sm:$0xff]
        %v203 = vld [vmem:[%s1 + $0x18] sm:$0xff]
        %v204 = vld [vmem:[%s1 + $0x20] sm:$0xff]
        %v205 = vld [vmem:[%s1 + $0x28] sm:$0xff]
        %v206 = vld [vmem:[%s197] sm:$0xff]
        %v207 = vld [vmem:[%s197 + $0x8] sm:$0xff]
        %v208 = vld [vmem:[%s197 + $0x10] sm:$0xff]
        %v209 = vld [vmem:[%s197 + $0x18] sm:$0xff]
        %v210 = vld [vmem:[%s197 + $0x20] sm:$0xff]
        %v211 = vld [vmem:[%s197 + $0x28] sm:$0xff]
        %v212 = vld [vmem:[%s197 + $0x30] sm:$0xff]
        %v213 = vld [vmem:[%s197 + $0x38] sm:$0xff]
        %v214 = vld [vmem:[%s2] sm:$0xff]
        %v215 = vld [vmem:[%s2 + $0x8] sm:$0xff]
        %v216 = vld [vmem:[%s2 + $0x10] sm:$0xff]
        %v217 = vld [vmem:[%s2 + $0x18] sm:$0xff]
        %v218 = vld [vmem:[%s2 + $0x20] sm:$0xff]
        %v219 = vld [vmem:[%s2 + $0x28] sm:$0xff]
        %221 = vset.pattern.permute.xlu0 0
        %222 = vperm.xlu0 %221, %v214
        %v223 = vpop.permute.xlu0 %222
        %226 = vset.pattern.permute.xlu0 0
        %227 = vperm.xlu0 %226, %v215
        %v228 = vpop.permute.xlu0 %227
        %231 = vset.pattern.permute.xlu0 0
        %232 = vperm.xlu0 %231, %v216
        %v233 = vpop.permute.xlu0 %232
        %236 = vset.pattern.permute.xlu0 0
        %237 = vperm.xlu0 %236, %v217
        %v238 = vpop.permute.xlu0 %237
        %241 = vset.pattern.permute.xlu0 0
        %242 = vperm.xlu0 %241, %v218
        %v243 = vpop.permute.xlu0 %242
        %246 = vset.pattern.permute.xlu0 0
        %247 = vperm.xlu0 %246, %v219
        %v248 = vpop.permute.xlu0 %247
        %vm250 = vcmask 261120
        %v252 = vsel %vm250, %v200, 0
        %v255 = vsel %vm250, %v201, 0
        %v258 = vsel %vm250, %v202, 0
        %v261 = vsel %vm250, %v203, 0
        %v264 = vsel %vm250, %v204, 0
        %v267 = vsel %vm250, %v205, 0
        %269 = vmatpush.msra.mxu0 0.0
        %270 = vmatpush.msra.mxu0 0.0
        %271 = vmatpush.msra.mxu0 0.0
        %272 = vmatpush.msra.mxu0 0.0
        %273 = vmatpush.msra.mxu0 0.0
        %274 = vmatpush.msra.mxu0 0.0
        %275 = vmatpush.msra.mxu0 0.0
        %276 = vmatpush.msra.mxu0 0.0
        %277 = vmatpush.msra.mxu0 0.0
        %278 = vmatpush.msra.mxu0 0.0
        %279 = vmatpush.msra.mxu0 0.0
        %280 = vmatpush.msra.mxu0 0.0
        %281 = vmatpush.msra.mxu0 %v212
        %282 = vmatpush.msra.mxu0 %v210
        %283 = vmatpush.msra.mxu0 %v208
        %284 = vmatpush.msra.mxu0 %v206
        %285 = vmatmul.f32.gmra.mxu0 %v252
        %v286 = vpop.f32.mrf.mxu0
        %v287 = vadd.f32 %v223, %v286
        %288 = vmatmul.f32.gmra.mxu0 %v255
        %v289 = vpop.f32.mrf.mxu0
        %v290 = vadd.f32 %v228, %v289
        %291 = vmatmul.f32.gmra.mxu0 %v258
        %v292 = vpop.f32.mrf.mxu0
        %v293 = vadd.f32 %v233, %v292
        %294 = vmatmul.f32.gmra.mxu0 %v261
        %v295 = vpop.f32.mrf.mxu0
        %v296 = vadd.f32 %v238, %v295
        %297 = vmatmul.f32.gmra.mxu0 %v264
        %v298 = vpop.f32.mrf.mxu0
        %v299 = vadd.f32 %v243, %v298
        %300 = vmatmul.f32.gmra.mxu0 %v267
        %v301 = vpop.f32.mrf.mxu0
        %v302 = vadd.f32 %v248, %v301
        %303 = vdwg.mxu0
        %304 = vmatpush.msra.mxu0 0.0
        %305 = vmatpush.msra.mxu0 0.0
        %306 = vmatpush.msra.mxu0 0.0
        %307 = vmatpush.msra.mxu0 0.0
        %308 = vmatpush.msra.mxu0 0.0
        %309 = vmatpush.msra.mxu0 0.0
        %310 = vmatpush.msra.mxu0 0.0
        %311 = vmatpush.msra.mxu0 0.0
        %312 = vmatpush.msra.mxu0 0.0
        %313 = vmatpush.msra.mxu0 0.0
        %314 = vmatpush.msra.mxu0 0.0
        %315 = vmatpush.msra.mxu0 0.0
        %316 = vmatpush.msra.mxu0 %v213
        %317 = vmatpush.msra.mxu0 %v211
        %318 = vmatpush.msra.mxu0 %v209
        %319 = vmatpush.msra.mxu0 %v207
        %320 = vmatmul.f32.gmra.mxu0 %v252
        %v321 = vpop.f32.mrf.mxu0
        %v322 = vadd.f32 %v223, %v321
        %323 = vmatmul.f32.gmra.mxu0 %v255
        %v324 = vpop.f32.mrf.mxu0
        %v325 = vadd.f32 %v228, %v324
        %326 = vmatmul.f32.gmra.mxu0 %v258
        %v327 = vpop.f32.mrf.mxu0
        %v328 = vadd.f32 %v233, %v327
        %329 = vmatmul.f32.gmra.mxu0 %v261
        %v330 = vpop.f32.mrf.mxu0
        %v331 = vadd.f32 %v238, %v330
        %332 = vmatmul.f32.gmra.mxu0 %v264
        %v333 = vpop.f32.mrf.mxu0
        %v334 = vadd.f32 %v243, %v333
        %335 = vmatmul.f32.gmra.mxu0 %v267
        %v336 = vpop.f32.mrf.mxu0
        %v337 = vadd.f32 %v248, %v336
        %338 = vdwg.mxu0
        %339 = vst [vmem:[%s188] sm:$0xff] %v287
        %340 = vst [vmem:[%s188 + $0x8] sm:$0xff] %v322
        %341 = vst [vmem:[%s188 + $0x10] sm:$0xff] %v290
        %342 = vst [vmem:[%s188 + $0x18] sm:$0xff] %v325
        %343 = vst [vmem:[%s188 + $0x20] sm:$0xff] %v293
        %344 = vst [vmem:[%s188 + $0x28] sm:$0xff] %v328
        %345 = vst [vmem:[%s188 + $0x30] sm:$0xff] %v296
        %346 = vst [vmem:[%s188 + $0x38] sm:$0xff] %v331
        %347 = vst [vmem:[%s188 + $0x40] sm:$0xff] %v299
        %348 = vst [vmem:[%s188 + $0x48] sm:$0xff] %v334
        %349 = vst [vmem:[%s188 + $0x50] sm:$0xff] %v302
        %350 = vst [vmem:[%s188 + $0x58] sm:$0xff] %v337
        %s351 = sand.u32 %s109, 1
        %s352 = scalar_lea.sflag [#allocation3], %s351
        %s353 = sand.u32 %s109, 1
        %s354 = smul.addr %s353, 96
        %s355 = scalar_lea.vmem [#allocation2], %s354
        // Predicated region
        $region33: #{tpu_custom_call.1} parent=31 // pred_check
          %p356 = pneg %p119
        $region34: #{tpu_custom_call.1} parent=31 // pred_check_branch
          %358 = sbr.rel (%p356) target = $region36
        $region35: #{tpu_custom_call.1} parent=31 // pred_region
          %s359 = smul.u32 2, %s22
          %361 = vsyncadd %s352, 0
          %s362 = smul.addr %s21, 12
          %s363 = sadd.s32 %s359, %s362
          %s364 = smul.addr %s363, 8
          %s365 = scalar_lea.hbm %s3, %s364
          %s366 = sshll.u32 %s355, 4
          %s367 = int_to_ptr.vmem [resolvable:$true] %s366
          %s368 = sshll.u32 %s365, 4
          %s369 = int_to_ptr.hbm [resolvable:$true] %s368
          %374 = dma.vmem_to_hbm [thread:$0]  %s367, 1536, %s369, %s352, 256, 256, 16
        $region36: #{tpu_custom_call.1} parent=31 // pred_fallthru
          _
      $region32: #{tpu_custom_call.1} parent=5 // pred_fallthru
        _
      %p375 = scmp.le.s32.totalorder 2, %s12
      // Predicated region
      $region37: #{tpu_custom_call.1} parent=5 // pred_check
        %p376 = pneg %p375
      $region38: #{tpu_custom_call.1} parent=5 // pred_check_branch
        %378 = sbr.rel (%p376) target = $region40
      $region39: #{tpu_custom_call.1} parent=5 // pred_region
        %s379 = ssub.s32 %s12, 2
        // Predicated region
        $region41: #{tpu_custom_call.1} parent=39 // pred_check
          %p380 = pneg %p125
        $region42: #{tpu_custom_call.1} parent=39 // pred_check_branch
          %382 = sbr.rel (%p380) target = $region44
        $region43: #{tpu_custom_call.1} parent=39 // pred_region
          %s383 = sand.u32 %s110, 1
          %s384 = scalar_lea.sflag [#allocation3], %s383
          %s385 = sand.u32 %s110, 1
          %s386 = smul.addr %s385, 96
          %s387 = scalar_lea.vmem [#allocation2], %s386
          %389 = dma.done %s384, 1536
        $region44: #{tpu_custom_call.1} parent=39 // pred_fallthru
          _
      $region40: #{tpu_custom_call.1} parent=5 // pred_fallthru
        _
    $region6: #{tpu_custom_call.1} parent=1 // loop_footer
      %s16 = sadd.s32 1, %s12
    $region7: #{tpu_custom_call.1} parent=1 // loop_footer_branch
      %11 = sbr.rel target = $region3
    $region8: #{tpu_custom_call.1} parent=1 // loop_exit
      _
    %390 = vsyncpa [#allocation3], 1
    %s391 = scalar_lea.sflag [#allocation3], 1
    %392 = vsyncpa %s391, 1

</llo_original>
